<compile_context>
chip_gen: v7x
topology: tpu7x:2x2x1
jax: 0.10.0
libtpu: 0.0.40
codegen_flags: <defaults>
</compile_context>

<pallas_src>
import jax
import jax.numpy as jnp
from jax.experimental import pallas as pl
from jax.experimental.pallas import tpu as pltpu


# ---------------------------------------------------------------------------
# Per-row loss (alpha*NCE + beta*RCE), shape (row_tile, 1) float32
# ---------------------------------------------------------------------------

def _row_losses(x_ref, y_ref, alpha, beta, num_classes, use_mxu):
    x = x_ref[...].astype(jnp.float32)
    y = y_ref[...].astype(jnp.float32)

    # Shared softmax pieces.  Row max stays on the XLU.
    m = jnp.max(x, axis=-1, keepdims=True)
    xs = x - m
    ex = jnp.exp(xs)  # EUP

    if use_mxu:
        # Offload class-axis (lane) reductions to the idle MXU.  HIGHEST
        # precision keeps f32 accuracy (default TPU matmul precision rounds
        # operands to bf16, which is not enough for the 1e-4 tolerance).
        ones_c = jnp.ones((num_classes, 1), jnp.float32)

        def rsum(t):
            return jnp.dot(t, ones_c, preferred_element_type=jnp.float32,
                           precision=jax.lax.Precision.HIGHEST)
    else:
        def rsum(t):
            return jnp.sum(t, axis=-1, keepdims=True)

    se = rsum(ex)
    log_se = jnp.log(se)

    # NormalizedSoftTargetCrossEntropy without materializing log_softmax:
    #   logp = xs - log_se
    #   -sum(y*logp) = log_se*sum(y) - sum(y*xs)
    #   -sum(logp)   = C*log_se     - sum(xs)
    sum_y = rsum(y)
    sum_yxs = rsum(y * xs)
    sum_xs = rsum(xs)
    num = log_se * sum_y - sum_yxs
    den = float(num_classes) * log_se - sum_xs
    nce = num / den

    # ReverseSoftTargetCrossEntropy:
    #   p = clamp(softmax(x), 1e-7, 1); loss = -sum(log(clamp(y,1e-4,1)) * p)
    # Exact per-row reciprocal; the upper clamp cannot bind (ex <= se), so only
    # the lower bound is applied.
    inv_se = pl.reciprocal(se)
    p = jnp.maximum(ex * inv_se, 1e-07)
    logy = jnp.log(jnp.clip(y, 0.0001, 1.0))
    rce = -rsum(logy * p)

    return alpha * nce + beta * rce


# ---------------------------------------------------------------------------
# Kernel bodies
# ---------------------------------------------------------------------------

def _col_to_lanes(col, o_ref, row_tile):
    """Write a (row_tile, 1) column lane-dense into o_ref block (1,1,row_tile).

    Done in <=128-row chunks with an iota equality mask + sublane reduce
    (all plainly-supported VPU/XLU ops; no reshape/transpose relayouts).
    """
    k0 = 0
    while k0 < row_tile:
        c = min(128, row_tile - k0)
        sub = col[k0:k0 + c, :]                                   # (c, 1)
        rid = jax.lax.broadcasted_iota(jnp.int32, (c, c), 0)
        cid = jax.lax.broadcasted_iota(jnp.int32, (c, c), 1)
        row = jnp.sum(jnp.where(rid == cid, sub, 0.0),
                      axis=0, keepdims=True)                      # (1, c)
        o_ref[:, :, k0:k0 + c] = row.reshape(1, 1, c)
        k0 += c


def _make_perrow_kernel(alpha, beta, num_classes, row_tile, use_mxu):
    def kernel(x_ref, y_ref, o_ref):
        loss = _row_losses(x_ref, y_ref, alpha, beta, num_classes, use_mxu)
        _col_to_lanes(loss, o_ref, row_tile)
    return kernel


def _make_partial_sum_kernel(alpha, beta, num_classes, row_tile, n_valid,
                             num_tiles, use_mxu):
    rows_last = n_valid - (num_tiles - 1) * row_tile   # valid rows in last tile
    needs_mask = rows_last < row_tile                  # padding exists?

    def kernel(x_ref, y_ref, o_ref):
        loss = _row_losses(x_ref, y_ref, alpha, beta, num_classes, use_mxu)

        if needs_mask:
            is_last = pl.program_id(0) == pl.num_programs(0) - 1

            @pl.when(jnp.logical_not(is_last))
            def _():
                o_ref[...] = jnp.sum(loss, axis=0,
                                     keepdims=True).reshape(1, 1, 1)

            @pl.when(is_last)
            def _():
                rid = jax.lax.broadcasted_iota(jnp.int32, (row_tile, 1), 0)
                masked = jnp.where(rid < rows_last, loss, 0.0)
                o_ref[...] = jnp.sum(masked, axis=0,
                                     keepdims=True).reshape(1, 1, 1)
        else:
            o_ref[...] = jnp.sum(loss, axis=0, keepdims=True).reshape(1, 1, 1)

    return kernel


# ---------------------------------------------------------------------------
# Tiling / VMEM helpers
# ---------------------------------------------------------------------------

def _vmem_budgets():
    """(tiling_budget_bytes, vmem_limit_bytes) derived from the actual chip."""
    try:
        cap = int(pltpu.get_tpu_info().vmem_capacity_bytes)
    except Exception:
        cap = 64 * 1024 * 1024     # conservative fallback (v7x physical VMEM)
    return (3 * cap) // 8, (3 * cap) // 4     # ~37.5% budget, ~75% limit


def _choose_tiling(n_rows, n_cols, itemsize, row_tile, vmem_budget,
                   max_row_tile=1024):
    """Pick (row_tile, num_tiles, padded_rows)."""
    if row_tile is None:
        # 2 inputs x 2 pipeline buffers in the producer dtype + ~7 live f32
        # full-tile temporaries inside the kernel body.
        per_row_bytes = n_cols * (2 * 2 * itemsize + 7 * 4)
        row_tile = max(8, min(max_row_tile,
                              vmem_budget // max(per_row_bytes, 1)))
    row_tile = max(8, int(row_tile))
    num_tiles = -(-n_rows // row_tile)           # cdiv
    rows = -(-n_rows // num_tiles)               # balance rows per tile
    row_tile = ((rows + 7) // 8) * 8             # sublane multiple of 8
    return int(row_tile), int(num_tiles), int(row_tile * num_tiles)


# ---------------------------------------------------------------------------
# Wrapper
# ---------------------------------------------------------------------------

def nce_and_rce(pred, labels, alpha=1.0, beta=1.0, reduction="mean",
                row_tile=None, use_mxu=None):
    """pred, labels: [..., C] float arrays (f32 or bf16).

    Returns a scalar for reduction='mean' or per-row losses (leading shape of
    the inputs) for reduction='none'.
    """
    if reduction not in ("mean", "none"):
        raise NotImplementedError(reduction)

    orig_shape = pred.shape
    C = orig_shape[-1]
    pred2 = pred.reshape(-1, C)
    labels2 = labels.reshape(-1, C)
    N = pred2.shape[0]

    itemsize = max(jnp.dtype(pred2.dtype).itemsize,
                   jnp.dtype(labels2.dtype).itemsize)
    vmem_budget, vmem_limit = _vmem_budgets()
    row_tile, num_tiles, pad_N = _choose_tiling(N, C, itemsize, row_tile,
                                                vmem_budget)

    if pad_N != N:
        pred2 = jnp.pad(pred2, ((0, pad_N - N), (0, 0)))
        labels2 = jnp.pad(labels2, ((0, pad_N - N), (0, 0)))

    in_specs = [
        pl.BlockSpec((row_tile, C), lambda i: (i, 0)),
        pl.BlockSpec((row_tile, C), lambda i: (i, 0)),
    ]
    cparams = pltpu.CompilerParams(
        dimension_semantics=("parallel",),          # megacore-splittable
        vmem_limit_bytes=int(vmem_limit))

    if use_mxu is None:
        use_mxu = C >= 128   # small C: XLU reduce is short; keep VPU path

    def _build(mxu_flag):
        if reduction == "mean":
            kern = _make_partial_sum_kernel(float(alpha), float(beta), C,
                                            row_tile, N, num_tiles, mxu_flag)
            out_shape = jax.ShapeDtypeStruct((num_tiles, 1, 1), jnp.float32)
            out_spec = pl.BlockSpec((1, 1, 1), lambda i: (i, 0, 0))
        else:
            kern = _make_perrow_kernel(float(alpha), float(beta), C,
                                       row_tile, mxu_flag)
            out_shape = jax.ShapeDtypeStruct((num_tiles, 1, row_tile),
                                             jnp.float32)
            out_spec = pl.BlockSpec((1, 1, row_tile), lambda i: (i, 0, 0))
        return pl.pallas_call(
            kern,
            out_shape=out_shape,
            grid_spec=pltpu.PrefetchScalarGridSpec(
                num_scalar_prefetch=0,
                grid=(num_tiles,),
                in_specs=in_specs,
                out_specs=out_spec),
            compiler_params=cparams)

    try:
        out = _build(use_mxu)(pred2, labels2)
    except Exception:
        if not use_mxu:
            raise
        # Fallback: some toolchains may reject the tall-skinny MXU reduction
        # dots; rebuild with plain XLU cross-lane reductions.
        out = _build(False)(pred2, labels2)

    if reduction == "mean":
        # Tiny wrapper-side combine of the per-tile partial sums (num_tiles
        # floats); keeps the grid fully parallel for v7x megacore.
        return jnp.sum(out) / jnp.float32(N)
    else:
        return out.reshape(pad_N)[:N].reshape(orig_shape[:-1])


# ---------------------------------------------------------------------------
# Pure-JAX reference mirroring the PyTorch module
# ---------------------------------------------------------------------------

def _reference(pred, labels, alpha=1.0, beta=1.0, reduction="mean"):
    x = pred.astype(jnp.float32)
    y = labels.astype(jnp.float32)
    logp = jax.nn.log_softmax(x, axis=-1)
    nce = -jnp.sum(y * logp, axis=-1) / -jnp.sum(logp, axis=-1)
    p = jnp.clip(jax.nn.softmax(x, axis=-1), 1e-07, 1.0)
    yc = jnp.clip(y, 0.0001, 1.0)
    rce = -jnp.sum(jnp.log(yc) * p, axis=-1)
    if reduction == "mean":
        return alpha * jnp.mean(nce) + beta * jnp.mean(rce)
    return alpha * nce + beta * rce


if __name__ == "__main__":
    key = jax.random.PRNGKey(0)
    k1, k2, k3, k4 = jax.random.split(key, 4)

    # ---- Small-C path (C=32): pure VPU/XLU reductions -----------------------
    N, C = 64, 32
    pred = jax.random.normal(k1, (N, C), dtype=jnp.float32)
    labels = jax.nn.softmax(
        jax.random.normal(k2, (N, C), dtype=jnp.float32), axis=-1)

    out_mean = jax.block_until_ready(nce_and_rce(pred, labels, 1.0, 1.0, "mean"))
    ref_mean = _reference(pred, labels, 1.0, 1.0, "mean")
    assert jnp.allclose(out_mean, ref_mean, rtol=1e-5, atol=1e-5), (out_mean, ref_mean)

    out_none = jax.block_until_ready(nce_and_rce(pred, labels, reduction="none"))
    ref_none = _reference(pred, labels, reduction="none")
    assert jnp.allclose(out_none, ref_none, rtol=1e-5, atol=1e-5)

    # Non-divisible N: exercises padding + last-tile masking in the mean path.
    out2 = jax.block_until_ready(nce_and_rce(pred[:50], labels[:50], reduction="mean"))
    ref2 = _reference(pred[:50], labels[:50], reduction="mean")
    assert jnp.allclose(out2, ref2, rtol=1e-5, atol=1e-5), (out2, ref2)

    # ---- Medium-C path (C=256): MXU reductions + multi-chunk lane transpose --
    N3, C3 = 200, 256
    pred3 = jax.random.normal(k3, (N3, C3), dtype=jnp.float32)
    labels3 = jax.nn.softmax(
        jax.random.normal(k4, (N3, C3), dtype=jnp.float32), axis=-1)

    out3m = jax.block_until_ready(nce_and_rce(pred3, labels3, reduction="mean"))
    ref3m = _reference(pred3, labels3, reduction="mean")
    assert jnp.allclose(out3m, ref3m, rtol=1e-4, atol=1e-4), (out3m, ref3m)

    out3n = jax.block_until_ready(nce_and_rce(pred3, labels3, reduction="none"))
    ref3n = _reference(pred3, labels3, reduction="none")
    assert jnp.allclose(out3n, ref3n, rtol=1e-4, atol=1e-4)

    # Forced small row_tile: multi-tile parallel grid + padding + last-tile mask.
    out4m = jax.block_until_ready(
        nce_and_rce(pred3, labels3, reduction="mean", row_tile=64))
    assert jnp.allclose(out4m, ref3m, rtol=1e-4, atol=1e-4), (out4m, ref3m)

    out4n = jax.block_until_ready(
        nce_and_rce(pred3, labels3, reduction="none", row_tile=64))
    assert jnp.allclose(out4n, ref3n, rtol=1e-4, atol=1e-4)

    print("KERNEL_OK")
</pallas_src>

<mosaic_0001>
module attributes {stable_mosaic.version = 11 : i64} {
  func.func @kernel(%arg0: i32, %arg1: memref<64x32xf32, #tpu.memory_space<vmem>>, %arg2: memref<64x32xf32, #tpu.memory_space<vmem>>, %arg3: memref<1x1x1xf32, #tpu.memory_space<vmem>>) attributes {dimension_semantics = [#tpu.dimension_semantics<parallel>], iteration_bounds = array<i64: 1>, scalar_prefetch = 0 : i64, scratch_operands = 0 : i64, tpu.core_type = #tpu.core_type<tc>, window_params = [{transform_indices = @transform_0, window_bounds = array<i64: 64, 32>}, {transform_indices = @transform_1, window_bounds = array<i64: 64, 32>}, {transform_indices = @transform_2, window_bounds = array<i64: 1, 1, 1>}]} {
    %c0 = arith.constant 0 : index
    %c0_0 = arith.constant 0 : index
    %0 = vector.load %arg1[%c0, %c0_0] : memref<64x32xf32, #tpu.memory_space<vmem>>, vector<64x32xf32>
    %c0_1 = arith.constant 0 : index
    %c0_2 = arith.constant 0 : index
    %1 = vector.load %arg2[%c0_1, %c0_2] : memref<64x32xf32, #tpu.memory_space<vmem>>, vector<64x32xf32>
    %cst = arith.constant dense<0xFF800000> : vector<64xf32>
    %2 = vector.multi_reduction <maximumf>, %0, %cst [1] : vector<64x32xf32> to vector<64xf32>
    %3 = vector.shape_cast %2 : vector<64xf32> to vector<64x1xf32>
    %4 = vector.broadcast %3 : vector<64x1xf32> to vector<64x32xf32>
    %5 = arith.subf %0, %4 : vector<64x32xf32>
    %6 = math.exp %5 : vector<64x32xf32>
    %cst_3 = arith.constant dense<0.000000e+00> : vector<64xf32>
    %7 = vector.multi_reduction <add>, %6, %cst_3 [1] : vector<64x32xf32> to vector<64xf32>
    %8 = vector.shape_cast %7 : vector<64xf32> to vector<64x1xf32>
    %9 = math.log %8 : vector<64x1xf32>
    %cst_4 = arith.constant dense<0.000000e+00> : vector<64xf32>
    %10 = vector.multi_reduction <add>, %1, %cst_4 [1] : vector<64x32xf32> to vector<64xf32>
    %11 = vector.shape_cast %10 : vector<64xf32> to vector<64x1xf32>
    %12 = arith.mulf %1, %5 : vector<64x32xf32>
    %cst_5 = arith.constant dense<0.000000e+00> : vector<64xf32>
    %13 = vector.multi_reduction <add>, %12, %cst_5 [1] : vector<64x32xf32> to vector<64xf32>
    %14 = vector.shape_cast %13 : vector<64xf32> to vector<64x1xf32>
    %cst_6 = arith.constant dense<0.000000e+00> : vector<64xf32>
    %15 = vector.multi_reduction <add>, %5, %cst_6 [1] : vector<64x32xf32> to vector<64xf32>
    %16 = vector.shape_cast %15 : vector<64xf32> to vector<64x1xf32>
    %17 = arith.mulf %9, %11 : vector<64x1xf32>
    %18 = arith.subf %17, %14 : vector<64x1xf32>
    %cst_7 = arith.constant 3.200000e+01 : f32
    %19 = vector.broadcast %cst_7 : f32 to vector<64x1xf32>
    %20 = arith.mulf %19, %9 : vector<64x1xf32>
    %21 = arith.subf %20, %16 : vector<64x1xf32>
    %22 = arith.divf %18, %21 : vector<64x1xf32>
    %23 = tpu.reciprocal %8 : vector<64x1xf32> -> vector<64x1xf32>
    %24 = vector.broadcast %23 : vector<64x1xf32> to vector<64x32xf32>
    %25 = arith.mulf %6, %24 : vector<64x32xf32>
    %cst_8 = arith.constant 1.000000e-07 : f32
    %26 = vector.broadcast %cst_8 : f32 to vector<64x32xf32>
    %27 = arith.maximumf %25, %26 : vector<64x32xf32>
    %cst_9 = arith.constant 9.99999974E-5 : f32
    %cst_10 = arith.constant 1.000000e+00 : f32
    %28 = vector.broadcast %cst_9 : f32 to vector<64x32xf32>
    %29 = arith.maximumf %28, %1 : vector<64x32xf32>
    %30 = vector.broadcast %cst_10 : f32 to vector<64x32xf32>
    %31 = arith.minimumf %30, %29 : vector<64x32xf32>
    %32 = math.log %31 : vector<64x32xf32>
    %33 = arith.mulf %32, %27 : vector<64x32xf32>
    %cst_11 = arith.constant dense<0.000000e+00> : vector<64xf32>
    %34 = vector.multi_reduction <add>, %33, %cst_11 [1] : vector<64x32xf32> to vector<64xf32>
    %35 = vector.shape_cast %34 : vector<64xf32> to vector<64x1xf32>
    %cst_12 = arith.constant 0.000000e+00 : f32
    %36 = vector.broadcast %cst_12 : f32 to vector<64x1xf32>
    %37 = arith.subf %36, %35 : vector<64x1xf32>
    %cst_13 = arith.constant 1.000000e+00 : f32
    %38 = vector.broadcast %cst_13 : f32 to vector<64x1xf32>
    %39 = arith.mulf %38, %22 : vector<64x1xf32>
    %cst_14 = arith.constant 1.000000e+00 : f32
    %40 = vector.broadcast %cst_14 : f32 to vector<64x1xf32>
    %41 = arith.mulf %40, %37 : vector<64x1xf32>
    %42 = arith.addf %39, %41 : vector<64x1xf32>
    %cst_15 = arith.constant dense<0.000000e+00> : vector<1xf32>
    %43 = vector.multi_reduction <add>, %42, %cst_15 [0] : vector<64x1xf32> to vector<1xf32>
    %44 = vector.shape_cast %43 : vector<1xf32> to vector<1x1xf32>
    %45 = vector.shape_cast %44 : vector<1x1xf32> to vector<1x1x1xf32>
    %c0_16 = arith.constant 0 : index
    %c0_17 = arith.constant 0 : index
    %c0_18 = arith.constant 0 : index
    %46 = vector.load %arg3[%c0_16, %c0_17, %c0_18] : memref<1x1x1xf32, #tpu.memory_space<vmem>>, vector<1x1x1xf32>
    tpu.vector_store %arg3[%c0_16, %c0_17, %c0_18], %45 {strides = array<i32>} : memref<1x1x1xf32, #tpu.memory_space<vmem>>, vector<1x1x1xf32>,
    return
  }
  func.func @transform_0(%arg0: i32) -> (i32, i32) {
    %c0_i32 = arith.constant 0 : i32
    %c0_i32_0 = arith.constant 0 : i32
    return %arg0, %c0_i32 : i32, i32
  }
  func.func @transform_1(%arg0: i32) -> (i32, i32) {
    %c0_i32 = arith.constant 0 : i32
    %c0_i32_0 = arith.constant 0 : i32
    return %arg0, %c0_i32 : i32, i32
  }
  func.func @transform_2(%arg0: i32) -> (i32, i32, i32) {
    %c0_i32 = arith.constant 0 : i32
    %c0_i32_0 = arith.constant 0 : i32
    %c0_i32_1 = arith.constant 0 : i32
    return %arg0, %c0_i32, %c0_i32_0 : i32, i32, i32
  }
}

</mosaic_0001>

<llo_original>
// kernel: tpu_custom_call.1
$region0: #{tpu_custom_call.1}
  #allocation0 [shape = 'u32[]', space=smem, size = 0x4, offset = 0x4, fixed_abs, tag = 'smem constant byte address 0x4 - core index']
  #allocation1 [shape = 'u32[144,128]{1,0:T(1,128)}', space=vmem, size = 0x12000, scoped, tag = 'internal scratch']
  %s0 = inlined_call_operand.vmem [shape: f32[64,32], index: 0, kind: input, shape index: {}]
  %s1 = inlined_call_operand.vmem [shape: f32[64,32], index: 1, kind: input, shape index: {}]
  %s2 = inlined_call_operand.hbm [shape: f32[1,1,1], index: 2, kind: output, shape index: {}]
  %s3 = sld [smem:[#allocation0]]
  $region18: #{tpu_custom_call.1} parent=0
    _
  %s5 = ssub.s32 1, %s3
  %s6 = scalar_select 0, %s5, %s3
  $region1: #{tpu_custom_call.1} parent=0
    #allocation2 [shape = 'u8[512]{0}', space=vmem, size = 0x400, scoped, tag = 'output window, operand 0, single buffered']
    #allocation3 [shape = 's32[1]{0}', space=sflag, size = 0x4, scoped, tag = 'scoped memory for tpu_custom_call.1']
    %7 = vsyncpa [#allocation3], 0
    // Predicated region
    $region2: #{tpu_custom_call.1} parent=1 // pred_check
      _
    $region3: #{tpu_custom_call.1} parent=1 // pred_check_branch
      %9 = sbr.rel (0) target = $region5
    $region4: #{tpu_custom_call.1} parent=1 // pred_region
      _
    $region5: #{tpu_custom_call.1} parent=1 // pred_fallthru
      _
    // Predicated region
    $region6: #{tpu_custom_call.1} parent=1 // pred_check
      _
    $region7: #{tpu_custom_call.1} parent=1 // pred_check_branch
      %11 = sbr.rel (0) target = $region9
    $region8: #{tpu_custom_call.1} parent=1 // pred_region
      _
    $region9: #{tpu_custom_call.1} parent=1 // pred_fallthru
      _
    %v12 = vld [vmem:[%s0] sm:$0xff]
    %v13 = vld [vmem:[%s0 + $0x8] sm:$0xff]
    %v14 = vld [vmem:[%s0 + $0x10] sm:$0xff]
    %v15 = vld [vmem:[%s0 + $0x18] sm:$0xff]
    %v16 = vld [vmem:[%s0 + $0x20] sm:$0xff]
    %v17 = vld [vmem:[%s0 + $0x28] sm:$0xff]
    %v18 = vld [vmem:[%s0 + $0x30] sm:$0xff]
    %v19 = vld [vmem:[%s0 + $0x38] sm:$0xff]
    %v20 = vld [vmem:[%s1] sm:$0xff]
    %v21 = vld [vmem:[%s1 + $0x8] sm:$0xff]
    %v22 = vld [vmem:[%s1 + $0x10] sm:$0xff]
    %v23 = vld [vmem:[%s1 + $0x18] sm:$0xff]
    %v24 = vld [vmem:[%s1 + $0x20] sm:$0xff]
    %v25 = vld [vmem:[%s1 + $0x28] sm:$0xff]
    %v26 = vld [vmem:[%s1 + $0x30] sm:$0xff]
    %v27 = vld [vmem:[%s1 + $0x38] sm:$0xff]
    %vm28 = vcmask 261120
    %v29 = vsel %vm28, %v12, -inf
    %30 = vmax.xlane.f32.xlu0 %v29
    %v31 = vpop.xlane.xlu0 %30
    %v32 = vsel %vm28, %v13, -inf
    %33 = vmax.xlane.f32.xlu0 %v32
    %v34 = vpop.xlane.xlu0 %33
    %v35 = vsel %vm28, %v14, -inf
    %36 = vmax.xlane.f32.xlu0 %v35
    %v37 = vpop.xlane.xlu0 %36
    %v38 = vsel %vm28, %v15, -inf
    %39 = vmax.xlane.f32.xlu0 %v38
    %v40 = vpop.xlane.xlu0 %39
    %v41 = vsel %vm28, %v16, -inf
    %42 = vmax.xlane.f32.xlu0 %v41
    %v43 = vpop.xlane.xlu0 %42
    %v44 = vsel %vm28, %v17, -inf
    %45 = vmax.xlane.f32.xlu0 %v44
    %v46 = vpop.xlane.xlu0 %45
    %v47 = vsel %vm28, %v18, -inf
    %48 = vmax.xlane.f32.xlu0 %v47
    %v49 = vpop.xlane.xlu0 %48
    %v50 = vsel %vm28, %v19, -inf
    %51 = vmax.xlane.f32.xlu0 %v50
    %v52 = vpop.xlane.xlu0 %51
    %v53 = vsub.f32 %v12, %v31
    %v54 = vsub.f32 %v13, %v34
    %v55 = vsub.f32 %v14, %v37
    %v56 = vsub.f32 %v15, %v40
    %v57 = vsub.f32 %v16, %v43
    %v58 = vsub.f32 %v17, %v46
    %v59 = vsub.f32 %v18, %v49
    %v60 = vsub.f32 %v19, %v52
    %v61 = vmul.f32 %v53, 1.442695
    %v62 = vpow.pop %v61
    %v63 = vmul.f32 %v54, 1.442695
    %v64 = vpow.pop %v63
    %v65 = vmul.f32 %v55, 1.442695
    %v66 = vpow.pop %v65
    %v67 = vmul.f32 %v56, 1.442695
    %v68 = vpow.pop %v67
    %v69 = vmul.f32 %v57, 1.442695
    %v70 = vpow.pop %v69
    %v71 = vmul.f32 %v58, 1.442695
    %v72 = vpow.pop %v71
    %v73 = vmul.f32 %v59, 1.442695
    %v74 = vpow.pop %v73
    %v75 = vmul.f32 %v60, 1.442695
    %v76 = vpow.pop %v75
    %v77 = vsel %vm28, %v62, 0.0
    %78 = vadd.xlane.f32.xlu0 %v77
    %v79 = vpop.xlane.xlu0 %78
    %v80 = vsel %vm28, %v64, 0.0
    %81 = vadd.xlane.f32.xlu0 %v80
    %v82 = vpop.xlane.xlu0 %81
    %v83 = vsel %vm28, %v66, 0.0
    %84 = vadd.xlane.f32.xlu0 %v83
    %v85 = vpop.xlane.xlu0 %84
    %v86 = vsel %vm28, %v68, 0.0
    %87 = vadd.xlane.f32.xlu0 %v86
    %v88 = vpop.xlane.xlu0 %87
    %v89 = vsel %vm28, %v70, 0.0
    %90 = vadd.xlane.f32.xlu0 %v89
    %v91 = vpop.xlane.xlu0 %90
    %v92 = vsel %vm28, %v72, 0.0
    %93 = vadd.xlane.f32.xlu0 %v92
    %v94 = vpop.xlane.xlu0 %93
    %v95 = vsel %vm28, %v74, 0.0
    %96 = vadd.xlane.f32.xlu0 %v95
    %v97 = vpop.xlane.xlu0 %96
    %v98 = vsel %vm28, %v76, 0.0
    %99 = vadd.xlane.f32.xlu0 %v98
    %v100 = vpop.xlane.xlu0 %99
    %v101 = vlog2.pop %v79
    %v102 = vmul.f32 %v101, 0.6931472
    %v103 = vlog2.pop %v82
    %v104 = vmul.f32 %v103, 0.6931472
    %v105 = vlog2.pop %v85
    %v106 = vmul.f32 %v105, 0.6931472
    %v107 = vlog2.pop %v88
    %v108 = vmul.f32 %v107, 0.6931472
    %v109 = vlog2.pop %v91
    %v110 = vmul.f32 %v109, 0.6931472
    %v111 = vlog2.pop %v94
    %v112 = vmul.f32 %v111, 0.6931472
    %v113 = vlog2.pop %v97
    %v114 = vmul.f32 %v113, 0.6931472
    %v115 = vlog2.pop %v100
    %v116 = vmul.f32 %v115, 0.6931472
    %v117 = vsel %vm28, %v20, 0.0
    %118 = vadd.xlane.f32.xlu0 %v117
    %v119 = vpop.xlane.xlu0 %118
    %v120 = vsel %vm28, %v21, 0.0
    %121 = vadd.xlane.f32.xlu0 %v120
    %v122 = vpop.xlane.xlu0 %121
    %v123 = vsel %vm28, %v22, 0.0
    %124 = vadd.xlane.f32.xlu0 %v123
    %v125 = vpop.xlane.xlu0 %124
    %v126 = vsel %vm28, %v23, 0.0
    %127 = vadd.xlane.f32.xlu0 %v126
    %v128 = vpop.xlane.xlu0 %127
    %v129 = vsel %vm28, %v24, 0.0
    %130 = vadd.xlane.f32.xlu0 %v129
    %v131 = vpop.xlane.xlu0 %130
    %v132 = vsel %vm28, %v25, 0.0
    %133 = vadd.xlane.f32.xlu0 %v132
    %v134 = vpop.xlane.xlu0 %133
    %v135 = vsel %vm28, %v26, 0.0
    %136 = vadd.xlane.f32.xlu0 %v135
    %v137 = vpop.xlane.xlu0 %136
    %v138 = vsel %vm28, %v27, 0.0
    %139 = vadd.xlane.f32.xlu0 %v138
    %v140 = vpop.xlane.xlu0 %139
    %v141 = vmul.f32 %v20, %v53
    %v142 = vmul.f32 %v21, %v54
    %v143 = vmul.f32 %v22, %v55
    %v144 = vmul.f32 %v23, %v56
    %v145 = vmul.f32 %v24, %v57
    %v146 = vmul.f32 %v25, %v58
    %v147 = vmul.f32 %v26, %v59
    %v148 = vmul.f32 %v27, %v60
    %v149 = vsel %vm28, %v141, 0.0
    %150 = vadd.xlane.f32.xlu0 %v149
    %v151 = vpop.xlane.xlu0 %150
    %v152 = vsel %vm28, %v142, 0.0
    %153 = vadd.xlane.f32.xlu0 %v152
    %v154 = vpop.xlane.xlu0 %153
    %v155 = vsel %vm28, %v143, 0.0
    %156 = vadd.xlane.f32.xlu0 %v155
    %v157 = vpop.xlane.xlu0 %156
    %v158 = vsel %vm28, %v144, 0.0
    %159 = vadd.xlane.f32.xlu0 %v158
    %v160 = vpop.xlane.xlu0 %159
    %v161 = vsel %vm28, %v145, 0.0
    %162 = vadd.xlane.f32.xlu0 %v161
    %v163 = vpop.xlane.xlu0 %162
    %v164 = vsel %vm28, %v146, 0.0
    %165 = vadd.xlane.f32.xlu0 %v164
    %v166 = vpop.xlane.xlu0 %165
    %v167 = vsel %vm28, %v147, 0.0
    %168 = vadd.xlane.f32.xlu0 %v167
    %v169 = vpop.xlane.xlu0 %168
    %v170 = vsel %vm28, %v148, 0.0
    %171 = vadd.xlane.f32.xlu0 %v170
    %v172 = vpop.xlane.xlu0 %171
    %v173 = vsel %vm28, %v53, 0.0
    %174 = vadd.xlane.f32.xlu0 %v173
    %v175 = vpop.xlane.xlu0 %174
    %v176 = vsel %vm28, %v54, 0.0
    %177 = vadd.xlane.f32.xlu0 %v176
    %v178 = vpop.xlane.xlu0 %177
    %v179 = vsel %vm28, %v55, 0.0
    %180 = vadd.xlane.f32.xlu0 %v179
    %v181 = vpop.xlane.xlu0 %180
    %v182 = vsel %vm28, %v56, 0.0
    %183 = vadd.xlane.f32.xlu0 %v182
    %v184 = vpop.xlane.xlu0 %183
    %v185 = vsel %vm28, %v57, 0.0
    %186 = vadd.xlane.f32.xlu0 %v185
    %v187 = vpop.xlane.xlu0 %186
    %v188 = vsel %vm28, %v58, 0.0
    %189 = vadd.xlane.f32.xlu0 %v188
    %v190 = vpop.xlane.xlu0 %189
    %v191 = vsel %vm28, %v59, 0.0
    %192 = vadd.xlane.f32.xlu0 %v191
    %v193 = vpop.xlane.xlu0 %192
    %v194 = vsel %vm28, %v60, 0.0
    %195 = vadd.xlane.f32.xlu0 %v194
    %v196 = vpop.xlane.xlu0 %195
    %v197 = vmul.f32 %v102, %v119
    %v198 = vmul.f32 %v104, %v122
    %v199 = vmul.f32 %v106, %v125
    %v200 = vmul.f32 %v108, %v128
    %v201 = vmul.f32 %v110, %v131
    %v202 = vmul.f32 %v112, %v134
    %v203 = vmul.f32 %v114, %v137
    %v204 = vmul.f32 %v116, %v140
    %v205 = vsub.f32 %v197, %v151
    %v206 = vsub.f32 %v198, %v154
    %v207 = vsub.f32 %v199, %v157
    %v208 = vsub.f32 %v200, %v160
    %v209 = vsub.f32 %v201, %v163
    %v210 = vsub.f32 %v202, %v166
    %v211 = vsub.f32 %v203, %v169
    %v212 = vsub.f32 %v204, %v172
    %v213 = vmul.f32 %v102, 32.0
    %v214 = vmul.f32 %v104, 32.0
    %v215 = vmul.f32 %v106, 32.0
    %v216 = vmul.f32 %v108, 32.0
    %v217 = vmul.f32 %v110, 32.0
    %v218 = vmul.f32 %v112, 32.0
    %v219 = vmul.f32 %v114, 32.0
    %v220 = vmul.f32 %v116, 32.0
    %v221 = vsub.f32 %v213, %v175
    %v222 = vsub.f32 %v214, %v178
    %v223 = vsub.f32 %v215, %v181
    %v224 = vsub.f32 %v216, %v184
    %v225 = vsub.f32 %v217, %v187
    %v226 = vsub.f32 %v218, %v190
    %v227 = vsub.f32 %v219, %v193
    %v228 = vsub.f32 %v220, %v196
    %v229 = vrcp.pop %v221
    %v230 = vmul.f32 %v205, %v229
    %v231 = vrcp.pop %v222
    %v232 = vmul.f32 %v206, %v231
    %v233 = vrcp.pop %v223
    %v234 = vmul.f32 %v207, %v233
    %v235 = vrcp.pop %v224
    %v236 = vmul.f32 %v208, %v235
    %v237 = vrcp.pop %v225
    %v238 = vmul.f32 %v209, %v237
    %v239 = vrcp.pop %v226
    %v240 = vmul.f32 %v210, %v239
    %v241 = vrcp.pop %v227
    %v242 = vmul.f32 %v211, %v241
    %v243 = vrcp.pop %v228
    %v244 = vmul.f32 %v212, %v243
    %v245 = vrcp.pop %v79
    %v246 = vrcp.pop %v82
    %v247 = vrcp.pop %v85
    %v248 = vrcp.pop %v88
    %v249 = vrcp.pop %v91
    %v250 = vrcp.pop %v94
    %v251 = vrcp.pop %v97
    %v252 = vrcp.pop %v100
    %v253 = vmul.f32 %v62, %v245
    %v254 = vmul.f32 %v64, %v246
    %v255 = vmul.f32 %v66, %v247
    %v256 = vmul.f32 %v68, %v248
    %v257 = vmul.f32 %v70, %v249
    %v258 = vmul.f32 %v72, %v250
    %v259 = vmul.f32 %v74, %v251
    %v260 = vmul.f32 %v76, %v252
    %v261 = vmax.f32 %v253, 1e-07
    %v262 = vmax.f32 %v254, 1e-07
    %v263 = vmax.f32 %v255, 1e-07
    %v264 = vmax.f32 %v256, 1e-07
    %v265 = vmax.f32 %v257, 1e-07
    %v266 = vmax.f32 %v258, 1e-07
    %v267 = vmax.f32 %v259, 1e-07
    %v268 = vmax.f32 %v260, 1e-07
    %v269 = vmax.f32 %v20, 0.0001
    %v270 = vmax.f32 %v21, 0.0001
    %v271 = vmax.f32 %v22, 0.0001
    %v272 = vmax.f32 %v23, 0.0001
    %v273 = vmax.f32 %v24, 0.0001
    %v274 = vmax.f32 %v25, 0.0001
    %v275 = vmax.f32 %v26, 0.0001
    %v276 = vmax.f32 %v27, 0.0001
    %v277 = vmin.f32 %v269, 1.0
    %v278 = vmin.f32 %v270, 1.0
    %v279 = vmin.f32 %v271, 1.0
    %v280 = vmin.f32 %v272, 1.0
    %v281 = vmin.f32 %v273, 1.0
    %v282 = vmin.f32 %v274, 1.0
    %v283 = vmin.f32 %v275, 1.0
    %v284 = vmin.f32 %v276, 1.0
    %v285 = vlog2.pop %v277
    %v286 = vmul.f32 %v285, 0.6931472
    %v287 = vlog2.pop %v278
    %v288 = vmul.f32 %v287, 0.6931472
    %v289 = vlog2.pop %v279
    %v290 = vmul.f32 %v289, 0.6931472
    %v291 = vlog2.pop %v280
    %v292 = vmul.f32 %v291, 0.6931472
    %v293 = vlog2.pop %v281
    %v294 = vmul.f32 %v293, 0.6931472
    %v295 = vlog2.pop %v282
    %v296 = vmul.f32 %v295, 0.6931472
    %v297 = vlog2.pop %v283
    %v298 = vmul.f32 %v297, 0.6931472
    %v299 = vlog2.pop %v284
    %v300 = vmul.f32 %v299, 0.6931472
    %v301 = vmul.f32 %v286, %v261
    %v302 = vmul.f32 %v288, %v262
    %v303 = vmul.f32 %v290, %v263
    %v304 = vmul.f32 %v292, %v264
    %v305 = vmul.f32 %v294, %v265
    %v306 = vmul.f32 %v296, %v266
    %v307 = vmul.f32 %v298, %v267
    %v308 = vmul.f32 %v300, %v268
    %v309 = vsel %vm28, %v301, 0.0
    %310 = vadd.xlane.f32.xlu0 %v309
    %v311 = vpop.xlane.xlu0 %310
    %v312 = vsel %vm28, %v302, 0.0
    %313 = vadd.xlane.f32.xlu0 %v312
    %v314 = vpop.xlane.xlu0 %313
    %v315 = vsel %vm28, %v303, 0.0
    %316 = vadd.xlane.f32.xlu0 %v315
    %v317 = vpop.xlane.xlu0 %316
    %v318 = vsel %vm28, %v304, 0.0
    %319 = vadd.xlane.f32.xlu0 %v318
    %v320 = vpop.xlane.xlu0 %319
    %v321 = vsel %vm28, %v305, 0.0
    %322 = vadd.xlane.f32.xlu0 %v321
    %v323 = vpop.xlane.xlu0 %322
    %v324 = vsel %vm28, %v306, 0.0
    %325 = vadd.xlane.f32.xlu0 %v324
    %v326 = vpop.xlane.xlu0 %325
    %v327 = vsel %vm28, %v307, 0.0
    %328 = vadd.xlane.f32.xlu0 %v327
    %v329 = vpop.xlane.xlu0 %328
    %v330 = vsel %vm28, %v308, 0.0
    %331 = vadd.xlane.f32.xlu0 %v330
    %v332 = vpop.xlane.xlu0 %331
    %v333 = vsub.f32 0.0, %v311
    %v334 = vsub.f32 0.0, %v314
    %v335 = vsub.f32 0.0, %v317
    %v336 = vsub.f32 0.0, %v320
    %v337 = vsub.f32 0.0, %v323
    %v338 = vsub.f32 0.0, %v326
    %v339 = vsub.f32 0.0, %v329
    %v340 = vsub.f32 0.0, %v332
    %v341 = vadd.f32 %v230, %v333
    %v342 = vadd.f32 %v232, %v334
    %v343 = vadd.f32 %v234, %v335
    %v344 = vadd.f32 %v236, %v336
    %v345 = vadd.f32 %v238, %v337
    %v346 = vadd.f32 %v240, %v338
    %v347 = vadd.f32 %v242, %v339
    %v348 = vadd.f32 %v244, %v340
    %v349 = vadd.f32 %v341, %v342
    %v350 = vadd.f32 %v349, %v343
    %v351 = vadd.f32 %v350, %v344
    %v352 = vadd.f32 %v351, %v345
    %v353 = vadd.f32 %v352, %v346
    %v354 = vadd.f32 %v353, %v347
    %v355 = vadd.f32 %v354, %v348
    %v356 = vrot.slane %v355, 4
    %v357 = vadd.f32 %v355, %v356
    %v358 = vrot.slane %v357, 2
    %v359 = vadd.f32 %v357, %v358
    %v360 = vrot.slane %v359, 1
    %v361 = vadd.f32 %v359, %v360
    %vm362 = vcmask 0
    %363 = vst.msk [vmem:[#allocation2] sm:$0x1] %vm362, %v361
    // Predicated region
    $region10: #{tpu_custom_call.1} parent=1 // pred_check
      _
    $region11: #{tpu_custom_call.1} parent=1 // pred_check_branch
      %365 = sbr.rel (0) target = $region13
    $region12: #{tpu_custom_call.1} parent=1 // pred_region
      %s367 = ssub.s32 16, 16
      %368 = vsyncadd [#allocation3], %s367
      %s370 = sshll.u32 [#allocation2], 4
      %s371 = int_to_ptr.vmem [resolvable:$true] %s370
      %373 = dma.vmem_to_hbm [thread:$0]  %s371, 16, %s2, [#allocation3]
    $region13: #{tpu_custom_call.1} parent=1 // pred_fallthru
      _
    // Predicated region
    $region14: #{tpu_custom_call.1} parent=1 // pred_check
      _
    $region15: #{tpu_custom_call.1} parent=1 // pred_check_branch
      %375 = sbr.rel (0) target = $region17
    $region16: #{tpu_custom_call.1} parent=1 // pred_region
      %376 = dma.done [#allocation3], 16
    $region17: #{tpu_custom_call.1} parent=1 // pred_fallthru
      _
    %377 = vsyncpa [#allocation3], 1

</llo_original>
